<compile_context>
chip_gen: v5e
topology: v5e:2x2
jax: 0.10.0
libtpu: 0.0.40
codegen_flags: <defaults>
</compile_context>

<pallas_src>
import functools

import numpy as np
import jax
import jax.numpy as jnp
from jax.experimental import pallas as pl
from jax.experimental.pallas import tpu as pltpu


def _round_up(x, m):
    return ((x + m - 1) // m) * m


# ---------------------------------------------------------------------------
# Kernel 1: fused projection    [feat_aug | el | er] = [x | 1] @ W_fused
#   feat_aug per head h: cols [h*fpad : h*fpad+F] = x @ W_src[:, h], col
#   h*fpad+F = 1.0 (softmax-denominator column), rest zero.  el/er come from
#   folding the attention vectors into the projection (W_el = W_src.attn_l).
#   feat_aug is emitted in bf16 (MXU operand, half the DMA); el/er stay f32
#   because they feed the exp() path.
# ---------------------------------------------------------------------------

def _proj_kernel(x_ref, w_ref, feat_ref, eler_ref, *, hfp):
    res = jnp.dot(x_ref[...], w_ref[...], preferred_element_type=jnp.float32)
    feat_ref[...] = res[:, :hfp].astype(jnp.bfloat16)
    eler_ref[...] = res[:, hfp:]


def fused_projection(x_aug, w_fused, hfp, tile_n):
    n_pad, d_in_aug = x_aug.shape
    d_out = w_fused.shape[1]
    n_eler = d_out - hfp
    return pl.pallas_call(
        functools.partial(_proj_kernel, hfp=hfp),
        out_shape=(jax.ShapeDtypeStruct((n_pad, hfp), jnp.bfloat16),
                   jax.ShapeDtypeStruct((n_pad, n_eler), jnp.float32)),
        grid=(n_pad // tile_n,),
        in_specs=[
            pl.BlockSpec((tile_n, d_in_aug), lambda i: (i, 0)),
            pl.BlockSpec((d_in_aug, d_out), lambda i: (0, 0)),
        ],
        out_specs=(pl.BlockSpec((tile_n, hfp), lambda i: (i, 0)),
                   pl.BlockSpec((tile_n, n_eler), lambda i: (i, 0))),
        compiler_params=pltpu.CompilerParams(
            dimension_semantics=("parallel",)),
    )(x_aug, w_fused)


# ---------------------------------------------------------------------------
# Kernel 2: edge-softmax attention + aggregation
#   all heads per grid step, block-sparse src walk via scalar prefetch,
#   flash-style online softmax with VMEM scratch, one lane-dense output store.
# ---------------------------------------------------------------------------

def _gat_attention_kernel(tl_ref, cnt_ref,
                          feat_ref, el_ref, er_ref, adj_ref, bias_ref,
                          o_ref, m_sc, acc_sc, *,
                          num_heads, out_feats, fpad, tile_src, out_width,
                          negative_slope, apply_relu, final_mean_logsoftmax,
                          src_resident):
    d = pl.program_id(0)
    s = pl.program_id(1)
    n_s = pl.num_programs(1)

    @pl.when(s == 0)
    def _init():
        m_sc[...] = jnp.full_like(m_sc, -jnp.inf)
        acc_sc[...] = jnp.zeros_like(acc_sc)

    @pl.when(s < cnt_ref[d])                 # skip padded (empty) tile steps
    def _compute():
        # in-kernel mask from the int8 adjacency tile: 0 on edges, -1e30 off
        adjf = adj_ref[...].astype(jnp.float32)              # (td, ts)
        neg = (adjf - 1.0) * jnp.float32(1e30)
        if src_resident:
            start = pl.multiple_of(tl_ref[d, s] * tile_src, tile_src)
            fs = feat_ref[pl.ds(start, tile_src), :]         # (ts, H*fpad) bf16
        else:
            fs = feat_ref[...]
        el = el_ref[...]                                     # (H, ts) f32
        er = er_ref[...]                                     # (td, H) f32
        for h in range(num_heads):                           # static unroll
            e = er[:, h:h + 1] + el[h:h + 1, :]              # (td, ts)
            e = jnp.maximum(e, negative_slope * e)           # LeakyReLU
            e = e + neg                                      # mask (f32 only!)
            m_prev = m_sc[h]
            m_new = jnp.maximum(m_prev, jnp.max(e, axis=-1, keepdims=True))
            a = jnp.exp(m_prev - m_new)
            p = jnp.exp(e - m_new)
            # feat block carries a ones column at col `out_feats`, so the
            # softmax denominator falls out of the same MXU pass.
            acc_sc[h] = a * acc_sc[h] + jnp.dot(
                p.astype(jnp.bfloat16), fs[:, h * fpad:(h + 1) * fpad],
                preferred_element_type=jnp.float32)
            m_sc[h] = m_new

    @pl.when(s == n_s - 1)
    def _finalize():
        outs = []
        for h in range(num_heads):
            acc_h = acc_sc[h]                                # (td, fpad)
            l = jnp.maximum(acc_h[:, out_feats:out_feats + 1], 1e-30)
            out_h = acc_h[:, :out_feats] * pl.reciprocal(l) + bias_ref[h]
            outs.append(out_h)
        if final_mean_logsoftmax:
            rst = outs[0]
            for h in range(1, num_heads):
                rst = rst + outs[h]
            rst = rst * jnp.float32(1.0 / num_heads)
            z = rst - jnp.max(rst, axis=-1, keepdims=True)
            lse = jnp.log(jnp.sum(jnp.exp(z), axis=-1, keepdims=True))
            res = z - lse
        else:
            if apply_relu:
                outs = [jnp.maximum(o, 0.0) for o in outs]
            res = jnp.concatenate(outs, axis=-1)
        pad = out_width - res.shape[-1]
        if pad:
            res = jnp.concatenate(
                [res, jnp.zeros((res.shape[0], pad), jnp.float32)], axis=-1)
        o_ref[...] = res                                     # one dense store


# ---------------------------------------------------------------------------
# GATConv layer + full GAT forward (wrapper glue)
# ---------------------------------------------------------------------------

def gat_conv(x, adj, layer_params, *, apply_relu, final_mean_logsoftmax,
             negative_slope=0.2):
    """One DGL-style GATConv((h, h[:n_dst])) over a dense int8 adjacency."""
    w_src, w_dst, attn_l, attn_r, bias = layer_params
    num_heads, out_feats = attn_l.shape[0], attn_l.shape[-1]
    d_in = w_src.shape[0]                   # logical input width
    n_src, d_x = x.shape                    # d_x >= d_in (lane-padded input)
    n_dst = adj.shape[0]
    fpad = _round_up(out_feats + 1, 8)      # per-head feat block (+ ones col)
    hfp = num_heads * fpad

    # ---- tiling: dst tiles multiple of 32 (int8 sublane tiling); try to
    #      expose >=2 dst tiles so a v7x megacore can split the parallel axis
    tile_src = min(1024, _round_up(n_src, 128))
    n_src_pad = _round_up(n_src, tile_src)
    tile_dst = min(512, max(32, _round_up((n_dst + 1) // 2, 32)))
    n_dst_pad = _round_up(n_dst, tile_dst)
    n_dst_tiles = n_dst_pad // tile_dst
    n_src_tiles = n_src_pad // tile_src

    # ---- fused projection weight (small, plain JAX; precomputable) ---------
    w3 = w_src.reshape(d_in, num_heads, out_feats)
    w_el = jnp.einsum('dhf,hf->dh', w3, attn_l.reshape(num_heads, out_feats))
    w_er = jnp.einsum('dhf,hf->dh',
                      w_dst.reshape(d_in, num_heads, out_feats),
                      attn_r.reshape(num_heads, out_feats))
    d_out = hfp + 2 * num_heads
    w_fused = jnp.zeros((d_x + 1, d_out), jnp.float32)
    for h in range(num_heads):
        w_fused = w_fused.at[:d_in, h * fpad:h * fpad + out_feats].set(w3[:, h])
        w_fused = w_fused.at[d_x, h * fpad + out_feats].set(1.0)  # ones column
    w_fused = w_fused.at[:d_in, hfp:hfp + num_heads].set(w_el)
    w_fused = w_fused.at[:d_in, hfp + num_heads:].set(w_er)

    x_aug = jnp.concatenate(
        [jnp.pad(x, ((0, n_src_pad - n_src), (0, 0))),
         jnp.ones((n_src_pad, 1), jnp.float32)], axis=1)

    feat, eler = fused_projection(x_aug, w_fused, hfp, tile_src)
    el_t = eler[:, :num_heads].T                              # (H, Nsrc_pad)
    er = jnp.pad(eler[:n_dst, num_heads:],                    # h_dst = h[:n_dst]
                 ((0, n_dst_pad - n_dst), (0, 0)))            # (Ndst_pad, H)

    # ---- int8 adjacency + block-sparsity metadata ---------------------------
    adj_i8 = jnp.pad(adj.astype(jnp.int8),
                     ((0, n_dst_pad - n_dst), (0, n_src_pad - n_src)))
    # TODO(synk): with a real sparse graph this metadata comes from the CSR
    # structure host-side (like DGL block building); here it is derived
    # eagerly from the dense mask (not jittable w.r.t. graph structure).
    adj_np = np.asarray(adj_i8) != 0
    occ = adj_np.reshape(n_dst_tiles, tile_dst,
                         n_src_tiles, tile_src).any(axis=(1, 3))
    counts = occ.sum(axis=1).astype(np.int32)                 # (n_dst_tiles,)
    max_cnt = max(int(counts.max()), 1)
    tile_list = np.zeros((n_dst_tiles, max_cnt), np.int32)
    for di in range(n_dst_tiles):
        idxs = np.nonzero(occ[di])[0].astype(np.int32)
        if idxs.size == 0:
            idxs = np.zeros((1,), np.int32)
        tile_list[di, :idxs.size] = idxs
        tile_list[di, idxs.size:] = idxs[-1]   # repeat last -> no extra DMA

    # ---- feat residency (v7x-safe 16 MiB budget) ----------------------------
    feat_bytes = n_src_pad * hfp * 2
    src_resident = feat_bytes <= (16 << 20)
    if src_resident:
        feat_spec = pl.BlockSpec((n_src_pad, hfp), lambda d, s, tl, cnt: (0, 0))
    else:
        feat_spec = pl.BlockSpec((tile_src, hfp),
                                 lambda d, s, tl, cnt: (tl[d, s], 0))

    out_width = _round_up(out_feats if final_mean_logsoftmax
                          else num_heads * out_feats, 128)

    kernel = functools.partial(
        _gat_attention_kernel, num_heads=num_heads, out_feats=out_feats,
        fpad=fpad, tile_src=tile_src, out_width=out_width,
        negative_slope=negative_slope, apply_relu=apply_relu,
        final_mean_logsoftmax=final_mean_logsoftmax, src_resident=src_resident)

    # explicit VMEM budget with headroom (resident feat + double-buffered
    # tiles + scratch + in-flight (td, ts) f32 temporaries), v7x-safe clamp.
    vmem_bytes = ((feat_bytes if src_resident else 2 * tile_src * hfp * 2)
                  + 2 * tile_dst * tile_src                       # adj (int8)
                  + 2 * num_heads * tile_src * 4                  # el
                  + 2 * tile_dst * 128 * 4                        # er (padded)
                  + 2 * tile_dst * out_width * 4                  # out
                  + num_heads * tile_dst * 256 * 4                # m + acc
                  + 4 * tile_dst * tile_src * 4)                  # e/p/neg tmp
    vmem_limit = int(min(max(2 * vmem_bytes + (16 << 20), 32 << 20), 64 << 20))

    out = pl.pallas_call(
        kernel,
        out_shape=jax.ShapeDtypeStruct((n_dst_pad, out_width), jnp.float32),
        grid_spec=pltpu.PrefetchScalarGridSpec(
            num_scalar_prefetch=2,
            grid=(n_dst_tiles, max_cnt),
            in_specs=[
                feat_spec,                                              # feat
                pl.BlockSpec((num_heads, tile_src),
                             lambda d, s, tl, cnt: (0, tl[d, s])),      # el
                pl.BlockSpec((tile_dst, num_heads),
                             lambda d, s, tl, cnt: (d, 0)),             # er
                pl.BlockSpec((tile_dst, tile_src),
                             lambda d, s, tl, cnt: (d, tl[d, s])),      # adj i8
                pl.BlockSpec((num_heads, 1, out_feats),
                             lambda d, s, tl, cnt: (0, 0, 0)),          # bias
            ],
            out_specs=pl.BlockSpec((tile_dst, out_width),
                                   lambda d, s, tl, cnt: (d, 0)),
            scratch_shapes=[
                pltpu.VMEM((num_heads, tile_dst, 1), jnp.float32),      # m
                pltpu.VMEM((num_heads, tile_dst, fpad), jnp.float32),   # acc|l
            ]),
        compiler_params=pltpu.CompilerParams(
            dimension_semantics=("parallel", "arbitrary"),
            vmem_limit_bytes=vmem_limit),
    )(jnp.asarray(tile_list, dtype=jnp.int32),
      jnp.asarray(counts, dtype=jnp.int32),
      feat, el_t, er, adj_i8, bias)
    return out[:n_dst]


def gat_forward(params, blocks, x):
    """Mirror of GAT.forward(blocks, x).  Hidden layers return a lane-padded
    (N, round_up(H*F,128)) slab that the next layer's zero-padded fused weight
    consumes directly; the last layer fuses head-mean + log_softmax."""
    h = x
    n_layers = len(params)
    for l, (layer_params, adj) in enumerate(zip(params, blocks)):
        last = (l == n_layers - 1)
        h = gat_conv(h, adj, layer_params,
                     apply_relu=not last,
                     final_mean_logsoftmax=last)
    n_classes = params[-1][2].shape[-1]
    return h[:, :n_classes]


# ---------------------------------------------------------------------------
# Reference (plain JAX, f32) for correctness
# ---------------------------------------------------------------------------

def gat_reference(params, blocks, x):
    h = x
    L = len(params)
    for l, ((W_src, W_dst, al, ar, b), adj) in enumerate(zip(params, blocks)):
        n_dst = adj.shape[0]
        h_dst = h[:n_dst]
        H, F = al.shape[0], al.shape[2]
        fs = (h @ W_src).reshape(-1, H, F)
        fd = (h_dst @ W_dst).reshape(-1, H, F)
        el = jnp.sum(fs * al.reshape(1, H, F), axis=-1)
        er = jnp.sum(fd * ar.reshape(1, H, F), axis=-1)
        e = er[:, None, :] + el[None, :, :]                  # (Nd, Ns, H)
        e = jnp.where(e > 0, e, 0.2 * e)
        mask = (adj > 0)[:, :, None]
        e = jnp.where(mask, e, -1e30)
        p = jnp.exp(e - jnp.max(e, axis=1, keepdims=True)) * mask
        alpha = p / jnp.sum(p, axis=1, keepdims=True)
        out = jnp.einsum('vuh,uhf->vhf', alpha, fs) + b.reshape(1, H, F)
        if l < L - 1:
            out = jnp.maximum(out, 0.0)
            h = out.reshape(n_dst, H * F)
        else:
            h = out
    h = jnp.mean(h, axis=1)
    return jax.nn.log_softmax(h, axis=-1)


# ---------------------------------------------------------------------------
# Deterministic parameters / graph blocks
# ---------------------------------------------------------------------------

def init_gat_params(key, in_feats, n_hidden, n_classes, n_layers, num_heads):
    params = []
    dims_in = [in_feats] + [n_hidden * num_heads] * (n_layers - 1)
    dims_out = [n_hidden] * (n_layers - 1) + [n_classes]
    for l in range(n_layers):
        key, k0, k1, k2, k3, k4 = jax.random.split(key, 6)
        din, dout = dims_in[l], dims_out[l]
        scale = 1.0 / jnp.sqrt(jnp.float32(din))
        W_src = jax.random.normal(k0, (din, num_heads * dout), jnp.float32) * scale
        W_dst = jax.random.normal(k1, (din, num_heads * dout), jnp.float32) * scale
        attn_l = jax.random.normal(k2, (num_heads, 1, dout), jnp.float32) * 0.1
        attn_r = jax.random.normal(k3, (num_heads, 1, dout), jnp.float32) * 0.1
        bias = jax.random.normal(k4, (num_heads, 1, dout), jnp.float32) * 0.01
        params.append((W_src, W_dst, attn_l, attn_r, bias))
    return params, key


def make_blocks(key, node_counts):
    blocks = []
    for l in range(len(node_counts) - 1):
        n_src, n_dst = node_counts[l], node_counts[l + 1]
        key, sub = jax.random.split(key)
        adj = (jax.random.uniform(sub, (n_dst, n_src)) < 0.3).astype(jnp.int8)
        # self loops (dst nodes are a prefix of src nodes) -> no zero in-degree
        idx = jnp.arange(n_dst)
        adj = adj.at[idx, idx].set(1)
        blocks.append(adj)
    return blocks, key


# ---------------------------------------------------------------------------

if __name__ == "__main__":
    in_feats, n_hidden, n_classes, n_layers, num_heads = 16, 8, 8, 3, 4
    node_counts = [64, 32, 16, 8]           # src/dst node counts per block

    key = jax.random.PRNGKey(0)
    params, key = init_gat_params(key, in_feats, n_hidden, n_classes,
                                  n_layers, num_heads)
    blocks, key = make_blocks(key, node_counts)
    key, kx = jax.random.split(key)
    x = jax.random.normal(kx, (node_counts[0], in_feats), jnp.float32)

    out = gat_forward(params, blocks, x)
    out = jax.block_until_ready(out)

    ref = gat_reference(params, blocks, x)
    assert out.shape == (node_counts[-1], n_classes), out.shape
    assert bool(jnp.all(jnp.isfinite(out)))
    # bf16 MXU operands in the aggregation (feat_src, p) -> loosen tolerance
    # vs. the pure-f32 reference (softmax / mask math itself stays f32).
    assert bool(jnp.allclose(out, ref, atol=5e-2, rtol=5e-2)), \
        float(jnp.max(jnp.abs(out - ref)))

    print("KERNEL_OK")
</pallas_src>

<mosaic_0001>
module attributes {stable_mosaic.version = 11 : i64} {
  func.func @_proj_kernel(%arg0: i32, %arg1: memref<128x17xf32, #tpu.memory_space<vmem>>, %arg2: memref<17x72xf32, #tpu.memory_space<vmem>>, %arg3: memref<128x64xbf16, #tpu.memory_space<vmem>>, %arg4: memref<128x8xf32, #tpu.memory_space<vmem>>) attributes {dimension_semantics = [#tpu.dimension_semantics<parallel>], iteration_bounds = array<i64: 1>, scalar_prefetch = 0 : i64, scratch_operands = 0 : i64, tpu.core_type = #tpu.core_type<tc>, window_params = [{transform_indices = @transform_0, window_bounds = array<i64: 128, 17>}, {pipeline_mode = #tpu.pipeline_mode<synchronous>, transform_indices = @transform_1, window_bounds = array<i64: 17, 72>}, {transform_indices = @transform_2, window_bounds = array<i64: 128, 64>}, {transform_indices = @transform_3, window_bounds = array<i64: 128, 8>}]} {
    %c0 = arith.constant 0 : index
    %c0_0 = arith.constant 0 : index
    %0 = vector.load %arg1[%c0, %c0_0] : memref<128x17xf32, #tpu.memory_space<vmem>>, vector<128x17xf32>
    %c0_1 = arith.constant 0 : index
    %c0_2 = arith.constant 0 : index
    %1 = vector.load %arg2[%c0_1, %c0_2] : memref<17x72xf32, #tpu.memory_space<vmem>>, vector<17x72xf32>
    %cst = arith.constant dense<0.000000e+00> : vector<128x72xf32>
    %2 = tpu.matmul %0, %1, %cst {dimension_numbers = #tpu.dot_dimension_numbers<[1], [0], [0], [1], [0, 0, 1, 1], [], []>} : vector<128x17xf32>, vector<17x72xf32>, vector<128x72xf32> -> vector<128x72xf32>
    %3 = vector.extract_strided_slice %2 {offsets = [0, 0], sizes = [128, 64], strides = [1, 1]} : vector<128x72xf32> to vector<128x64xf32>
    %4 = arith.truncf %3 : vector<128x64xf32> to vector<128x64xbf16>
    %c0_3 = arith.constant 0 : index
    %c0_4 = arith.constant 0 : index
    %5 = vector.load %arg3[%c0_3, %c0_4] : memref<128x64xbf16, #tpu.memory_space<vmem>>, vector<128x64xbf16>
    tpu.vector_store %arg3[%c0_3, %c0_4], %4 {strides = array<i32>} : memref<128x64xbf16, #tpu.memory_space<vmem>>, vector<128x64xbf16>,
    %6 = vector.extract_strided_slice %2 {offsets = [0, 64], sizes = [128, 8], strides = [1, 1]} : vector<128x72xf32> to vector<128x8xf32>
    %c0_5 = arith.constant 0 : index
    %c0_6 = arith.constant 0 : index
    %7 = vector.load %arg4[%c0_5, %c0_6] : memref<128x8xf32, #tpu.memory_space<vmem>>, vector<128x8xf32>
    tpu.vector_store %arg4[%c0_5, %c0_6], %6 {strides = array<i32>} : memref<128x8xf32, #tpu.memory_space<vmem>>, vector<128x8xf32>,
    return
  }
  func.func @transform_0(%arg0: i32) -> (i32, i32) {
    %c0_i32 = arith.constant 0 : i32
    %c0_i32_0 = arith.constant 0 : i32
    return %arg0, %c0_i32 : i32, i32
  }
  func.func @transform_1(%arg0: i32) -> (i32, i32) {
    %c0_i32 = arith.constant 0 : i32
    %c0_i32_0 = arith.constant 0 : i32
    %c0_i32_1 = arith.constant 0 : i32
    return %c0_i32, %c0_i32_0 : i32, i32
  }
  func.func @transform_2(%arg0: i32) -> (i32, i32) {
    %c0_i32 = arith.constant 0 : i32
    %c0_i32_0 = arith.constant 0 : i32
    return %arg0, %c0_i32 : i32, i32
  }
  func.func @transform_3(%arg0: i32) -> (i32, i32) {
    %c0_i32 = arith.constant 0 : i32
    %c0_i32_0 = arith.constant 0 : i32
    return %arg0, %c0_i32 : i32, i32
  }
}

</mosaic_0001>

<llo_original>
// kernel: tpu_custom_call.1
$region0: #{tpu_custom_call.1}
  #allocation0 [shape = 'u32[]', space=smem, size = 0x4, offset = 0x4, fixed_abs, tag = 'smem constant byte address 0x4 - core index']
  #allocation1 [shape = 'u32[72,128]{1,0:T(1,128)}', space=vmem, size = 0x9000, scoped, tag = 'internal scratch']
  %s0 = inlined_call_operand.vmem [shape: f32[128,17], index: 0, kind: input, shape index: {}]
  %s1 = inlined_call_operand.vmem [shape: f32[17,72], index: 1, kind: input, shape index: {}]
  %s2 = inlined_call_operand.vmem [shape: bf16[128,64], index: 2, kind: output, shape index: {0}]
  %s3 = inlined_call_operand.vmem [shape: f32[128,8], index: 3, kind: output, shape index: {1}]
  %4 = xla_tuple %s2, %s3
  %s5 = sld [smem:[#allocation0]]
  $region26: #{tpu_custom_call.1} parent=0
    _
  %s7 = ssub.s32 1, %s5
  %s8 = scalar_select 0, %s7, %s5
  // Predicated region
  $region2: #{tpu_custom_call.1} parent=0 // pred_check
    _
  $region3: #{tpu_custom_call.1} parent=0 // pred_check_branch
    %10 = sbr.rel (0) target = $region5
  $region4: #{tpu_custom_call.1} parent=0 // pred_region
    _
  $region5: #{tpu_custom_call.1} parent=0 // pred_fallthru
    _
  // Predicated region
  $region6: #{tpu_custom_call.1} parent=0 // pred_check
    _
  $region7: #{tpu_custom_call.1} parent=0 // pred_check_branch
    %12 = sbr.rel (0) target = $region9
  $region8: #{tpu_custom_call.1} parent=0 // pred_region
    _
  $region9: #{tpu_custom_call.1} parent=0 // pred_fallthru
    _
  %v13 = vld [vmem:[%s0] sm:$0xff]
  %v14 = vld [vmem:[%s0 + $0x8] sm:$0xff]
  %v15 = vld [vmem:[%s0 + $0x10] sm:$0xff]
  %v16 = vld [vmem:[%s0 + $0x18] sm:$0xff]
  %v17 = vld [vmem:[%s0 + $0x20] sm:$0xff]
  %v18 = vld [vmem:[%s0 + $0x28] sm:$0xff]
  %v19 = vld [vmem:[%s0 + $0x30] sm:$0xff]
  %v20 = vld [vmem:[%s0 + $0x38] sm:$0xff]
  %v21 = vld [vmem:[%s0 + $0x40] sm:$0xff]
  %v22 = vld [vmem:[%s0 + $0x48] sm:$0xff]
  %v23 = vld [vmem:[%s0 + $0x50] sm:$0xff]
  %v24 = vld [vmem:[%s0 + $0x58] sm:$0xff]
  %v25 = vld [vmem:[%s0 + $0x60] sm:$0xff]
  %v26 = vld [vmem:[%s0 + $0x68] sm:$0xff]
  %v27 = vld [vmem:[%s0 + $0x70] sm:$0xff]
  %v28 = vld [vmem:[%s0 + $0x78] sm:$0xff]
  %v29 = vld [vmem:[%s1] sm:$0xff]
  %v30 = vld [vmem:[%s1 + $0x8] sm:$0xff]
  %v31 = vld [vmem:[%s1 + $0x10] sm:$0x1]
  %vm32 = vcmask 138240
  %v34 = vsel %vm32, %v13, 0
  %v37 = vsel %vm32, %v14, 0
  %v40 = vsel %vm32, %v15, 0
  %v43 = vsel %vm32, %v16, 0
  %v46 = vsel %vm32, %v17, 0
  %v49 = vsel %vm32, %v18, 0
  %v52 = vsel %vm32, %v19, 0
  %v55 = vsel %vm32, %v20, 0
  %v58 = vsel %vm32, %v21, 0
  %v61 = vsel %vm32, %v22, 0
  %v64 = vsel %vm32, %v23, 0
  %v67 = vsel %vm32, %v24, 0
  %v70 = vsel %vm32, %v25, 0
  %v73 = vsel %vm32, %v26, 0
  %v76 = vsel %vm32, %v27, 0
  %v79 = vsel %vm32, %v28, 0
  %vm81 = vcmask 1040384
  %v83 = vsel %vm81, %v31, 0
  %85 = vmatpush.msra.mxu0 0.0
  %86 = vmatpush.msra.mxu0 0.0
  %87 = vmatpush.msra.mxu0 0.0
  %88 = vmatpush.msra.mxu0 0.0
  %89 = vmatpush.msra.mxu0 0.0
  %90 = vmatpush.msra.mxu0 0.0
  %91 = vmatpush.msra.mxu0 0.0
  %92 = vmatpush.msra.mxu0 0.0
  %93 = vmatpush.msra.mxu0 0.0
  %94 = vmatpush.msra.mxu0 0.0
  %95 = vmatpush.msra.mxu0 0.0
  %96 = vmatpush.msra.mxu0 0.0
  %97 = vmatpush.msra.mxu0 0.0
  %98 = vmatpush.msra.mxu0 %v83
  %99 = vmatpush.msra.mxu0 %v30
  %100 = vmatpush.msra.mxu0 %v29
  %101 = vmatmul.f32.gmra.mxu0 %v34
  %v102 = vpop.f32.mrf.mxu0
  %v103 = vadd.f32 0.0, %v102
  %104 = vmatmul.f32.gmra.mxu0 %v37
  %v105 = vpop.f32.mrf.mxu0
  %v106 = vadd.f32 0.0, %v105
  %107 = vmatmul.f32.gmra.mxu0 %v40
  %v108 = vpop.f32.mrf.mxu0
  %v109 = vadd.f32 0.0, %v108
  %110 = vmatmul.f32.gmra.mxu0 %v43
  %v111 = vpop.f32.mrf.mxu0
  %v112 = vadd.f32 0.0, %v111
  %113 = vmatmul.f32.gmra.mxu0 %v46
  %v114 = vpop.f32.mrf.mxu0
  %v115 = vadd.f32 0.0, %v114
  %116 = vmatmul.f32.gmra.mxu0 %v49
  %v117 = vpop.f32.mrf.mxu0
  %v118 = vadd.f32 0.0, %v117
  %119 = vmatmul.f32.gmra.mxu0 %v52
  %v120 = vpop.f32.mrf.mxu0
  %v121 = vadd.f32 0.0, %v120
  %122 = vmatmul.f32.gmra.mxu0 %v55
  %v123 = vpop.f32.mrf.mxu0
  %v124 = vadd.f32 0.0, %v123
  %125 = vmatmul.f32.gmra.mxu0 %v58
  %v126 = vpop.f32.mrf.mxu0
  %v127 = vadd.f32 0.0, %v126
  %128 = vmatmul.f32.gmra.mxu0 %v61
  %v129 = vpop.f32.mrf.mxu0
  %v130 = vadd.f32 0.0, %v129
  %131 = vmatmul.f32.gmra.mxu0 %v64
  %v132 = vpop.f32.mrf.mxu0
  %v133 = vadd.f32 0.0, %v132
  %134 = vmatmul.f32.gmra.mxu0 %v67
  %v135 = vpop.f32.mrf.mxu0
  %v136 = vadd.f32 0.0, %v135
  %137 = vmatmul.f32.gmra.mxu0 %v70
  %v138 = vpop.f32.mrf.mxu0
  %v139 = vadd.f32 0.0, %v138
  %140 = vmatmul.f32.gmra.mxu0 %v73
  %v141 = vpop.f32.mrf.mxu0
  %v142 = vadd.f32 0.0, %v141
  %143 = vmatmul.f32.gmra.mxu0 %v76
  %v144 = vpop.f32.mrf.mxu0
  %v145 = vadd.f32 0.0, %v144
  %146 = vmatmul.f32.gmra.mxu0 %v79
  %v147 = vpop.f32.mrf.mxu0
  %v148 = vadd.f32 0.0, %v147
  %149 = vdwg.mxu0
  %v150 = vpack.c.bf16 %v103, %v103
  %v151 = vpack.c.bf16 %v106, %v106
  %v152 = vpack.c.bf16 %v109, %v109
  %v153 = vpack.c.bf16 %v112, %v112
  %v154 = vpack.c.bf16 %v115, %v115
  %v155 = vpack.c.bf16 %v118, %v118
  %v156 = vpack.c.bf16 %v121, %v121
  %v157 = vpack.c.bf16 %v124, %v124
  %v158 = vpack.c.bf16 %v127, %v127
  %v159 = vpack.c.bf16 %v130, %v130
  %v160 = vpack.c.bf16 %v133, %v133
  %v161 = vpack.c.bf16 %v136, %v136
  %v162 = vpack.c.bf16 %v139, %v139
  %v163 = vpack.c.bf16 %v142, %v142
  %v164 = vpack.c.bf16 %v145, %v145
  %v165 = vpack.c.bf16 %v148, %v148
  %vm166 = vcmask 519168
  %167 = vst.msk [vmem:[%s2] sm:$0xf] %vm166, %v150
  %168 = vst.msk [vmem:[%s2 + $0x4] sm:$0xf] %vm166, %v151
  %169 = vst.msk [vmem:[%s2 + $0x8] sm:$0xf] %vm166, %v152
  %170 = vst.msk [vmem:[%s2 + $0xc] sm:$0xf] %vm166, %v153
  %171 = vst.msk [vmem:[%s2 + $0x10] sm:$0xf] %vm166, %v154
  %172 = vst.msk [vmem:[%s2 + $0x14] sm:$0xf] %vm166, %v155
  %173 = vst.msk [vmem:[%s2 + $0x18] sm:$0xf] %vm166, %v156
  %174 = vst.msk [vmem:[%s2 + $0x1c] sm:$0xf] %vm166, %v157
  %175 = vst.msk [vmem:[%s2 + $0x20] sm:$0xf] %vm166, %v158
  %176 = vst.msk [vmem:[%s2 + $0x24] sm:$0xf] %vm166, %v159
  %177 = vst.msk [vmem:[%s2 + $0x28] sm:$0xf] %vm166, %v160
  %178 = vst.msk [vmem:[%s2 + $0x2c] sm:$0xf] %vm166, %v161
  %179 = vst.msk [vmem:[%s2 + $0x30] sm:$0xf] %vm166, %v162
  %180 = vst.msk [vmem:[%s2 + $0x34] sm:$0xf] %vm166, %v163
  %181 = vst.msk [vmem:[%s2 + $0x38] sm:$0xf] %vm166, %v164
  %182 = vst.msk [vmem:[%s2 + $0x3c] sm:$0xf] %vm166, %v165
  %199 = vrot.lane.b32.xlu0 %v103, 64
  %v200 = vpop.permute.xlu0 %199
  %201 = vrot.lane.b32.xlu0 %v106, 64
  %v202 = vpop.permute.xlu0 %201
  %203 = vrot.lane.b32.xlu0 %v109, 64
  %v204 = vpop.permute.xlu0 %203
  %205 = vrot.lane.b32.xlu0 %v112, 64
  %v206 = vpop.permute.xlu0 %205
  %207 = vrot.lane.b32.xlu0 %v115, 64
  %v208 = vpop.permute.xlu0 %207
  %209 = vrot.lane.b32.xlu0 %v118, 64
  %v210 = vpop.permute.xlu0 %209
  %211 = vrot.lane.b32.xlu0 %v121, 64
  %v212 = vpop.permute.xlu0 %211
  %213 = vrot.lane.b32.xlu0 %v124, 64
  %v214 = vpop.permute.xlu0 %213
  %215 = vrot.lane.b32.xlu0 %v127, 64
  %v216 = vpop.permute.xlu0 %215
  %217 = vrot.lane.b32.xlu0 %v130, 64
  %v218 = vpop.permute.xlu0 %217
  %219 = vrot.lane.b32.xlu0 %v133, 64
  %v220 = vpop.permute.xlu0 %219
  %221 = vrot.lane.b32.xlu0 %v136, 64
  %v222 = vpop.permute.xlu0 %221
  %223 = vrot.lane.b32.xlu0 %v139, 64
  %v224 = vpop.permute.xlu0 %223
  %225 = vrot.lane.b32.xlu0 %v142, 64
  %v226 = vpop.permute.xlu0 %225
  %227 = vrot.lane.b32.xlu0 %v145, 64
  %v228 = vpop.permute.xlu0 %227
  %229 = vrot.lane.b32.xlu0 %v148, 64
  %v230 = vpop.permute.xlu0 %229
  %vm247 = vcmask 64512
  %248 = vst.msk [vmem:[%s3] sm:$0xff] %vm247, %v200
  %249 = vst.msk [vmem:[%s3 + $0x8] sm:$0xff] %vm247, %v202
  %250 = vst.msk [vmem:[%s3 + $0x10] sm:$0xff] %vm247, %v204
  %251 = vst.msk [vmem:[%s3 + $0x18] sm:$0xff] %vm247, %v206
  %252 = vst.msk [vmem:[%s3 + $0x20] sm:$0xff] %vm247, %v208
  %253 = vst.msk [vmem:[%s3 + $0x28] sm:$0xff] %vm247, %v210
  %254 = vst.msk [vmem:[%s3 + $0x30] sm:$0xff] %vm247, %v212
  %255 = vst.msk [vmem:[%s3 + $0x38] sm:$0xff] %vm247, %v214
  %256 = vst.msk [vmem:[%s3 + $0x40] sm:$0xff] %vm247, %v216
  %257 = vst.msk [vmem:[%s3 + $0x48] sm:$0xff] %vm247, %v218
  %258 = vst.msk [vmem:[%s3 + $0x50] sm:$0xff] %vm247, %v220
  %259 = vst.msk [vmem:[%s3 + $0x58] sm:$0xff] %vm247, %v222
  %260 = vst.msk [vmem:[%s3 + $0x60] sm:$0xff] %vm247, %v224
  %261 = vst.msk [vmem:[%s3 + $0x68] sm:$0xff] %vm247, %v226
  %262 = vst.msk [vmem:[%s3 + $0x70] sm:$0xff] %vm247, %v228
  %263 = vst.msk [vmem:[%s3 + $0x78] sm:$0xff] %vm247, %v230
  // Predicated region
  $region10: #{tpu_custom_call.1} parent=0 // pred_check
    _
  $region11: #{tpu_custom_call.1} parent=0 // pred_check_branch
    %265 = sbr.rel (0) target = $region13
  $region12: #{tpu_custom_call.1} parent=0 // pred_region
    _
  $region13: #{tpu_custom_call.1} parent=0 // pred_fallthru
    _
  // Predicated region
  $region14: #{tpu_custom_call.1} parent=0 // pred_check
    _
  $region15: #{tpu_custom_call.1} parent=0 // pred_check_branch
    %267 = sbr.rel (0) target = $region17
  $region16: #{tpu_custom_call.1} parent=0 // pred_region
    _
  $region17: #{tpu_custom_call.1} parent=0 // pred_fallthru
    _
  // Predicated region
  $region18: #{tpu_custom_call.1} parent=0 // pred_check
    _
  $region19: #{tpu_custom_call.1} parent=0 // pred_check_branch
    %269 = sbr.rel (0) target = $region21
  $region20: #{tpu_custom_call.1} parent=0 // pred_region
    _
  $region21: #{tpu_custom_call.1} parent=0 // pred_fallthru
    _
  // Predicated region
  $region22: #{tpu_custom_call.1} parent=0 // pred_check
    _
  $region23: #{tpu_custom_call.1} parent=0 // pred_check_branch
    %271 = sbr.rel (0) target = $region25
  $region24: #{tpu_custom_call.1} parent=0 // pred_region
    _
  $region25: #{tpu_custom_call.1} parent=0 // pred_fallthru
    _

</llo_original>
